<compile_context>
chip_gen: v7x
topology: tpu7x:2x2x1
jax: 0.10.0
libtpu: 0.0.40
codegen_flags: <defaults>
</compile_context>

<pallas_src>
import jax
import jax.numpy as jnp
from jax.experimental import pallas as pl
from jax.experimental.pallas import tpu as pltpu

HIDDEN = 64        # logical hidden width of the PyTorch model
H_PAD = 128        # hidden padded to one full vreg lane width
A_OUT = 8          # output lanes written to HBM (action_dim padded up to 8)
BIAS_ROWS = 8      # f32 bias slab rows (sublane tile); rows 0..2 used


def _round_up(x, m):
    return (x + m - 1) // m * m


def qnet_kernel(x_ref, w1_ref, w23_ref, bias_ref, o_ref):
    """Fused 3-layer MLP on one (TB, S) batch tile.

    x_ref    : (TB, S)          f32   streamed along the batch grid
    w1_ref   : (S, H_PAD)       f32   VMEM resident (constant index_map)
    w23_ref  : (2*H_PAD, H_PAD) bf16  [w2 | w3] stacked row-wise, VMEM resident
    bias_ref : (8, H_PAD)       f32   rows 0/1/2 = b1/b2/b3 (zero padded)
    o_ref    : (TB, A_OUT)      f32   only the first A_OUT lanes are written
    """
    h_pad = w23_ref.shape[1]
    x = x_ref[...]                                   # (TB, S) f32
    s_dim = x.shape[1]

    b1 = bias_ref[0:1, :]
    b2 = bias_ref[1:2, :]
    b3 = bias_ref[2:3, :]

    # fc1: contraction dim (state_dim) is tiny, so do an f32 outer-product
    # accumulation on the VPU instead of padding x for an MXU pass.
    h1 = b1 + x[:, 0:1] * w1_ref[0:1, :]
    for s in range(1, s_dim):                        # static unroll (S small)
        h1 = h1 + x[:, s:s + 1] * w1_ref[s:s + 1, :]
    h1 = jnp.maximum(h1, 0.0)                        # (TB, 128) f32

    # fc2 / fc3: bf16 MXU matmuls with f32 accumulation, f32 bias/ReLU on VPU.
    w2 = w23_ref[pl.ds(0, h_pad), :]                 # (128, 128) bf16
    w3 = w23_ref[pl.ds(h_pad, h_pad), :]             # (128, 128) bf16
    h2 = jnp.dot(h1.astype(jnp.bfloat16), w2,
                 preferred_element_type=jnp.float32) + b2
    h2 = jnp.maximum(h2, 0.0)
    q = jnp.dot(h2.astype(jnp.bfloat16), w3,
                preferred_element_type=jnp.float32) + b3

    # Keep HBM writeback small: only the first A_OUT lanes carry real Q-values.
    o_ref[...] = q[:, :o_ref.shape[1]]


def pack_params(w1, b1, w2, b2, w3, b3):
    """Pack (in,out)-layout weights/biases into kernel-friendly slabs.

    Zero padding keeps the math identical: padded hidden lanes / output lanes
    multiply against zeros and contribute exactly 0.0.
    Returns (w1f f32 [S,128], w23 bf16 [256,128], bias f32 [8,128]).
    """
    S, H = w1.shape
    A = w3.shape[1]
    assert H == HIDDEN and A <= A_OUT
    w1f = jnp.zeros((S, H_PAD), jnp.float32).at[:, :H].set(w1)
    w2p = jnp.zeros((H_PAD, H_PAD), jnp.float32).at[:H, :H].set(w2)
    w3p = jnp.zeros((H_PAD, H_PAD), jnp.float32).at[:H, :A].set(w3)
    w23 = jnp.concatenate([w2p, w3p], axis=0).astype(jnp.bfloat16)
    bias = jnp.zeros((BIAS_ROWS, H_PAD), jnp.float32)
    bias = bias.at[0, :H].set(b1.reshape(-1))
    bias = bias.at[1, :H].set(b2.reshape(-1))
    bias = bias.at[2, :A].set(b3.reshape(-1))
    return w1f, w23, bias


def _choose_batch_tile(batch, block_b):
    """Batch tile: multiple of 16, never bigger than the (8-aligned) batch,
    and small enough that there are >= 2 grid blocks when possible (so v7x's
    two TensorCores both get work)."""
    tb = min(_round_up(block_b, 16), _round_up(pl.cdiv(batch, 2), 16))
    tb = min(tb, _round_up(batch, 8))
    return max(tb, 8)


def qnetwork_forward(x, w1f, w23, bias, action_dim, *, block_b=512):
    """x: [B, S] f32. Returns [B, action_dim] f32 Q-values."""
    B, S = x.shape
    assert w1f.shape == (S, H_PAD) and action_dim <= A_OUT

    TB = _choose_batch_tile(B, block_b)
    n_blocks = pl.cdiv(B, TB)

    flops = 2 * B * (S * HIDDEN + HIDDEN * HIDDEN + HIDDEN * action_dim)
    bytes_accessed = (x.size * 4 + w1f.size * 4 + w23.size * 2 +
                      bias.size * 4 + B * A_OUT * 4)

    out = pl.pallas_call(
        qnet_kernel,
        out_shape=jax.ShapeDtypeStruct((B, A_OUT), jnp.float32),
        grid=(n_blocks,),
        in_specs=[
            # x streamed / double-buffered along the batch grid; last block is
            # partial when TB does not divide B (OOB output rows are dropped).
            pl.BlockSpec((TB, S), lambda i: (i, 0)),
            # Parameters: constant index_map -> one DMA each, VMEM resident.
            pl.BlockSpec((S, H_PAD), lambda i: (0, 0)),
            pl.BlockSpec(w23.shape, lambda i: (0, 0)),
            pl.BlockSpec(bias.shape, lambda i: (0, 0)),
        ],
        out_specs=pl.BlockSpec((TB, A_OUT), lambda i: (i, 0)),
        compiler_params=pltpu.CompilerParams(
            dimension_semantics=("parallel",)),
        cost_estimate=pl.CostEstimate(flops=flops, transcendentals=0,
                                      bytes_accessed=bytes_accessed),
    )(x, w1f, w23, bias)

    # Tiny slice (32 B/row): downstream consumers must not see padded lanes.
    return out[:, :action_dim]


def init_params(key, state_dim, action_dim, hidden=HIDDEN):
    """Deterministic synthetic params (PyTorch-style uniform fan-in init),
    stored as (in, out) so x @ W + b == PyTorch's x @ W.T + b."""
    ks = jax.random.split(key, 6)

    def lin(kw, kb, fan_in, fan_out):
        bound = 1.0 / jnp.sqrt(fan_in)
        w = jax.random.uniform(kw, (fan_in, fan_out), jnp.float32, -bound, bound)
        b = jax.random.uniform(kb, (1, fan_out), jnp.float32, -bound, bound)
        return w, b

    w1, b1 = lin(ks[0], ks[1], state_dim, hidden)
    w2, b2 = lin(ks[2], ks[3], hidden, hidden)
    w3, b3 = lin(ks[4], ks[5], hidden, action_dim)
    return {"w1": w1, "b1": b1, "w2": w2, "b2": b2, "w3": w3, "b3": b3}


if __name__ == "__main__":
    key = jax.random.PRNGKey(0)
    k_x, k_p = jax.random.split(key)

    # CartPole-like: state_shape=(4,), action_shape=2. Batch deliberately not a
    # multiple of the chosen tile to exercise the partial-block path.
    batch, state_dim, action_dim = 200, 4, 2
    x = jax.random.normal(k_x, (batch, state_dim), jnp.float32)
    params = init_params(k_p, state_dim, action_dim)
    w1f, w23, bias = pack_params(params["w1"], params["b1"], params["w2"],
                                 params["b2"], params["w3"], params["b3"])

    out = qnetwork_forward(x, w1f, w23, bias, action_dim, block_b=512)
    out = jax.block_until_ready(out)
    assert out.shape == (batch, action_dim)

    # Reference with the same mixed precision as the kernel:
    # f32 fc1, bf16 operands + f32 accumulation for fc2/fc3, f32 biases.
    h1 = jnp.maximum(x @ params["w1"] + params["b1"], 0.0)
    h2 = jnp.maximum(
        jnp.dot(h1.astype(jnp.bfloat16), params["w2"].astype(jnp.bfloat16),
                preferred_element_type=jnp.float32) + params["b2"], 0.0)
    ref = jnp.dot(h2.astype(jnp.bfloat16), params["w3"].astype(jnp.bfloat16),
                  preferred_element_type=jnp.float32) + params["b3"]
    max_err = float(jnp.max(jnp.abs(out - ref)))
    assert jnp.allclose(out, ref, atol=5e-3, rtol=5e-3), max_err

    # Looser sanity check against full-f32 PyTorch-equivalent math.
    h1f = jnp.maximum(x @ params["w1"] + params["b1"], 0.0)
    h2f = jnp.maximum(h1f @ params["w2"] + params["b2"], 0.0)
    reff = h2f @ params["w3"] + params["b3"]
    assert jnp.allclose(out, reff, atol=5e-2, rtol=5e-2)

    print("KERNEL_OK")
</pallas_src>

<mosaic_0001>
module attributes {stable_mosaic.version = 11 : i64} {
  func.func @qnet_kernel(%arg0: i32, %arg1: memref<112x4xf32, #tpu.memory_space<vmem>>, %arg2: memref<4x128xf32, #tpu.memory_space<vmem>>, %arg3: memref<256x128xbf16, #tpu.memory_space<vmem>>, %arg4: memref<8x128xf32, #tpu.memory_space<vmem>>, %arg5: memref<112x8xf32, #tpu.memory_space<vmem>>) attributes {dimension_semantics = [#tpu.dimension_semantics<parallel>], iteration_bounds = array<i64: 2>, scalar_prefetch = 0 : i64, scratch_operands = 0 : i64, tpu.core_type = #tpu.core_type<tc>, window_params = [{transform_indices = @transform_0, window_bounds = array<i64: 112, 4>}, {pipeline_mode = #tpu.pipeline_mode<synchronous>, transform_indices = @transform_1, window_bounds = array<i64: 4, 128>}, {pipeline_mode = #tpu.pipeline_mode<synchronous>, transform_indices = @transform_2, window_bounds = array<i64: 256, 128>}, {pipeline_mode = #tpu.pipeline_mode<synchronous>, transform_indices = @transform_3, window_bounds = array<i64: 8, 128>}, {transform_indices = @transform_4, window_bounds = array<i64: 112, 8>}]} {
    %c0 = arith.constant 0 : index
    %c0_0 = arith.constant 0 : index
    %0 = vector.load %arg1[%c0, %c0_0] : memref<112x4xf32, #tpu.memory_space<vmem>>, vector<112x4xf32>
    %c0_1 = arith.constant 0 : index
    %c0_2 = arith.constant 0 : index
    %1 = vector.load %arg4[%c0_1, %c0_2] : memref<8x128xf32, #tpu.memory_space<vmem>>, vector<1x128xf32>
    %c1 = arith.constant 1 : index
    %c0_3 = arith.constant 0 : index
    %2 = vector.load %arg4[%c1, %c0_3] : memref<8x128xf32, #tpu.memory_space<vmem>>, vector<1x128xf32>
    %c2 = arith.constant 2 : index
    %c0_4 = arith.constant 0 : index
    %3 = vector.load %arg4[%c2, %c0_4] : memref<8x128xf32, #tpu.memory_space<vmem>>, vector<1x128xf32>
    %4 = vector.extract_strided_slice %0 {offsets = [0, 0], sizes = [112, 1], strides = [1, 1]} : vector<112x4xf32> to vector<112x1xf32>
    %c0_5 = arith.constant 0 : index
    %c0_6 = arith.constant 0 : index
    %5 = vector.load %arg2[%c0_5, %c0_6] : memref<4x128xf32, #tpu.memory_space<vmem>>, vector<1x128xf32>
    %6 = vector.broadcast %4 : vector<112x1xf32> to vector<112x128xf32>
    %7 = vector.broadcast %5 : vector<1x128xf32> to vector<112x128xf32>
    %8 = arith.mulf %6, %7 : vector<112x128xf32>
    %9 = vector.broadcast %1 : vector<1x128xf32> to vector<112x128xf32>
    %10 = arith.addf %9, %8 : vector<112x128xf32>
    %11 = vector.extract_strided_slice %0 {offsets = [0, 1], sizes = [112, 1], strides = [1, 1]} : vector<112x4xf32> to vector<112x1xf32>
    %c1_7 = arith.constant 1 : index
    %c0_8 = arith.constant 0 : index
    %12 = vector.load %arg2[%c1_7, %c0_8] : memref<4x128xf32, #tpu.memory_space<vmem>>, vector<1x128xf32>
    %13 = vector.broadcast %11 : vector<112x1xf32> to vector<112x128xf32>
    %14 = vector.broadcast %12 : vector<1x128xf32> to vector<112x128xf32>
    %15 = arith.mulf %13, %14 : vector<112x128xf32>
    %16 = arith.addf %10, %15 : vector<112x128xf32>
    %17 = vector.extract_strided_slice %0 {offsets = [0, 2], sizes = [112, 1], strides = [1, 1]} : vector<112x4xf32> to vector<112x1xf32>
    %c2_9 = arith.constant 2 : index
    %c0_10 = arith.constant 0 : index
    %18 = vector.load %arg2[%c2_9, %c0_10] : memref<4x128xf32, #tpu.memory_space<vmem>>, vector<1x128xf32>
    %19 = vector.broadcast %17 : vector<112x1xf32> to vector<112x128xf32>
    %20 = vector.broadcast %18 : vector<1x128xf32> to vector<112x128xf32>
    %21 = arith.mulf %19, %20 : vector<112x128xf32>
    %22 = arith.addf %16, %21 : vector<112x128xf32>
    %23 = vector.extract_strided_slice %0 {offsets = [0, 3], sizes = [112, 1], strides = [1, 1]} : vector<112x4xf32> to vector<112x1xf32>
    %c3 = arith.constant 3 : index
    %c0_11 = arith.constant 0 : index
    %24 = vector.load %arg2[%c3, %c0_11] : memref<4x128xf32, #tpu.memory_space<vmem>>, vector<1x128xf32>
    %25 = vector.broadcast %23 : vector<112x1xf32> to vector<112x128xf32>
    %26 = vector.broadcast %24 : vector<1x128xf32> to vector<112x128xf32>
    %27 = arith.mulf %25, %26 : vector<112x128xf32>
    %28 = arith.addf %22, %27 : vector<112x128xf32>
    %cst = arith.constant 0.000000e+00 : f32
    %29 = vector.broadcast %cst : f32 to vector<112x128xf32>
    %30 = arith.maximumf %28, %29 : vector<112x128xf32>
    %c0_12 = arith.constant 0 : index
    %c0_13 = arith.constant 0 : index
    %31 = vector.load %arg3[%c0_12, %c0_13] : memref<256x128xbf16, #tpu.memory_space<vmem>>, vector<128x128xbf16>
    %c128 = arith.constant 128 : index
    %c0_14 = arith.constant 0 : index
    %32 = vector.load %arg3[%c128, %c0_14] : memref<256x128xbf16, #tpu.memory_space<vmem>>, vector<128x128xbf16>
    %33 = arith.truncf %30 : vector<112x128xf32> to vector<112x128xbf16>
    %cst_15 = arith.constant dense<0.000000e+00> : vector<112x128xf32>
    %34 = tpu.matmul %33, %31, %cst_15 {dimension_numbers = #tpu.dot_dimension_numbers<[1], [0], [0], [1], [0, 0, 1, 1], [], []>} : vector<112x128xbf16>, vector<128x128xbf16>, vector<112x128xf32> -> vector<112x128xf32>
    %35 = vector.broadcast %2 : vector<1x128xf32> to vector<112x128xf32>
    %36 = arith.addf %34, %35 : vector<112x128xf32>
    %cst_16 = arith.constant 0.000000e+00 : f32
    %37 = vector.broadcast %cst_16 : f32 to vector<112x128xf32>
    %38 = arith.maximumf %36, %37 : vector<112x128xf32>
    %39 = arith.truncf %38 : vector<112x128xf32> to vector<112x128xbf16>
    %cst_17 = arith.constant dense<0.000000e+00> : vector<112x128xf32>
    %40 = tpu.matmul %39, %32, %cst_17 {dimension_numbers = #tpu.dot_dimension_numbers<[1], [0], [0], [1], [0, 0, 1, 1], [], []>} : vector<112x128xbf16>, vector<128x128xbf16>, vector<112x128xf32> -> vector<112x128xf32>
    %41 = vector.broadcast %3 : vector<1x128xf32> to vector<112x128xf32>
    %42 = arith.addf %40, %41 : vector<112x128xf32>
    %43 = vector.extract_strided_slice %42 {offsets = [0, 0], sizes = [112, 8], strides = [1, 1]} : vector<112x128xf32> to vector<112x8xf32>
    %c0_18 = arith.constant 0 : index
    %c0_19 = arith.constant 0 : index
    %44 = vector.load %arg5[%c0_18, %c0_19] : memref<112x8xf32, #tpu.memory_space<vmem>>, vector<112x8xf32>
    tpu.vector_store %arg5[%c0_18, %c0_19], %43 {strides = array<i32>} : memref<112x8xf32, #tpu.memory_space<vmem>>, vector<112x8xf32>,
    return
  }
  func.func @transform_0(%arg0: i32) -> (i32, i32) {
    %c0_i32 = arith.constant 0 : i32
    %c0_i32_0 = arith.constant 0 : i32
    return %arg0, %c0_i32 : i32, i32
  }
  func.func @transform_1(%arg0: i32) -> (i32, i32) {
    %c0_i32 = arith.constant 0 : i32
    %c0_i32_0 = arith.constant 0 : i32
    %c0_i32_1 = arith.constant 0 : i32
    return %c0_i32, %c0_i32_0 : i32, i32
  }
  func.func @transform_2(%arg0: i32) -> (i32, i32) {
    %c0_i32 = arith.constant 0 : i32
    %c0_i32_0 = arith.constant 0 : i32
    %c0_i32_1 = arith.constant 0 : i32
    return %c0_i32, %c0_i32_0 : i32, i32
  }
  func.func @transform_3(%arg0: i32) -> (i32, i32) {
    %c0_i32 = arith.constant 0 : i32
    %c0_i32_0 = arith.constant 0 : i32
    %c0_i32_1 = arith.constant 0 : i32
    return %c0_i32, %c0_i32_0 : i32, i32
  }
  func.func @transform_4(%arg0: i32) -> (i32, i32) {
    %c0_i32 = arith.constant 0 : i32
    %c0_i32_0 = arith.constant 0 : i32
    return %arg0, %c0_i32 : i32, i32
  }
}

</mosaic_0001>

<llo_original>
// kernel: tpu_custom_call.1
$region0: #{tpu_custom_call.1}
  #allocation0 [shape = 'u32[]', space=smem, size = 0x4, offset = 0x4, fixed_abs, tag = 'smem constant byte address 0x4 - core index']
  #allocation1 [shape = 'u32[144,128]{1,0:T(1,128)}', space=vmem, size = 0x12000, scoped, tag = 'internal scratch']
  %s0 = inlined_call_operand.vmem [shape: f32[200,4], index: 0, kind: input, shape index: {}]
  %s1 = inlined_call_operand.vmem [shape: f32[4,128], index: 1, kind: input, shape index: {}]
  %s2 = inlined_call_operand.vmem [shape: bf16[256,128], index: 2, kind: input, shape index: {}]
  %s3 = inlined_call_operand.vmem [shape: f32[8,128], index: 3, kind: input, shape index: {}]
  %s4 = inlined_call_operand.vmem [shape: f32[200,8], index: 4, kind: output, shape index: {}]
  %s5 = sld [smem:[#allocation0]]
  $region97: #{tpu_custom_call.1} parent=0
    _
  %s7 = ssub.s32 1, %s5
  %s8 = scalar_select 0, %s7, %s5
  $region1: #{tpu_custom_call.1} parent=0
    #allocation2 [shape = 'u8[114688]{0}', space=vmem, size = 0x1c000, scoped, tag = 'output window, operand 0']
    loop: start=0, step=1, limit=4
    $region2: #{tpu_custom_call.1} parent=1 // loop_pre_header
      _
    $region3: #{tpu_custom_call.1} parent=1 // loop_header
      %s10 = sphi 0, %s14
      %p11 = scmp.ge.s32.totalorder %s10, 4
      %s20 = sphi 0, %s22
      %s23 = sphi 0, %s20
      %s24 = sphi 0, %s23
      %s40 = sphi 0, %s24
      %s44 = sphi 0, %s44
      %s46 = sphi 0, %s44
      %s47 = sphi 0, %s46
      %s61 = sphi 0, %s47
      %s65 = sphi 0, %s65
      %s67 = sphi 0, %s65
      %s68 = sphi 0, %s67
      %s82 = sphi 0, %s68
      %s86 = sphi 0, %s86
      %s88 = sphi 0, %s86
      %s89 = sphi 0, %s88
      %s103 = sphi 0, %s89
      %s109 = sphi 0, %s111
      %s112 = sphi 0, %s109
      %s113 = sphi 0, %s112
      %s129 = sphi 0, %s113
    $region4: #{tpu_custom_call.1} parent=1 // loop_header_branch
      %13 = sbr.rel (%p11) target = $region8
    $region5: #{tpu_custom_call.1} parent=1 // loop_body
      %s15 = ssub.s32 %s10, 1
      %s16 = ssub.s32 %s10, 2
      %s17 = sadd.s32 %s10, 1
      %s18 = ssub.s32 %s10, %s17
      %p19 = scmp.eq.s32.totalorder %s18, 0
      %s21 = sadd.s32 %s20, 1
      %s22 = scalar_select %p19, %s20, %s21
      %p25 = pneg %p19
      %p26 = scmp.eq.s32.totalorder %s10, 1
      %p27 = por %p25, %p26
      %p28 = scmp.ne.s32.totalorder %s20, %s23
      %p29 = scmp.eq.s32.totalorder %s10, 0
      %p30 = por %p28, %p29
      %p31 = scmp.ne.s32.totalorder %s20, %s23
      %p32 = scmp.eq.s32.totalorder %s15, 1
      %p33 = por %p31, %p32
      %p34 = scmp.ne.s32.totalorder %s23, %s24
      %p35 = scmp.eq.s32.totalorder %s15, 0
      %p36 = por %p34, %p35
      %p37 = scmp.ne.s32.totalorder %s23, %s24
      %p38 = scmp.eq.s32.totalorder %s16, 1
      %p39 = por %p37, %p38
      %p41 = scmp.ne.s32.totalorder %s24, %s40
      %p42 = scmp.eq.s32.totalorder %s16, 0
      %p43 = por %p41, %p42
      %s45 = sadd.s32 %s44, 1
      %p48 = scmp.eq.s32.totalorder %s10, 1
      %p49 = scmp.ne.s32.totalorder %s44, %s46
      %p50 = scmp.eq.s32.totalorder %s10, 0
      %p51 = por %p49, %p50
      %p52 = scmp.ne.s32.totalorder %s44, %s46
      %p53 = scmp.eq.s32.totalorder %s15, 1
      %p54 = por %p52, %p53
      %p55 = scmp.ne.s32.totalorder %s46, %s47
      %p56 = scmp.eq.s32.totalorder %s15, 0
      %p57 = por %p55, %p56
      %p58 = scmp.ne.s32.totalorder %s46, %s47
      %p59 = scmp.eq.s32.totalorder %s16, 1
      %p60 = por %p58, %p59
      %p62 = scmp.ne.s32.totalorder %s47, %s61
      %p63 = scmp.eq.s32.totalorder %s16, 0
      %p64 = por %p62, %p63
      %s66 = sadd.s32 %s65, 1
      %p69 = scmp.eq.s32.totalorder %s10, 1
      %p70 = scmp.ne.s32.totalorder %s65, %s67
      %p71 = scmp.eq.s32.totalorder %s10, 0
      %p72 = por %p70, %p71
      %p73 = scmp.ne.s32.totalorder %s65, %s67
      %p74 = scmp.eq.s32.totalorder %s15, 1
      %p75 = por %p73, %p74
      %p76 = scmp.ne.s32.totalorder %s67, %s68
      %p77 = scmp.eq.s32.totalorder %s15, 0
      %p78 = por %p76, %p77
      %p79 = scmp.ne.s32.totalorder %s67, %s68
      %p80 = scmp.eq.s32.totalorder %s16, 1
      %p81 = por %p79, %p80
      %p83 = scmp.ne.s32.totalorder %s68, %s82
      %p84 = scmp.eq.s32.totalorder %s16, 0
      %p85 = por %p83, %p84
      %s87 = sadd.s32 %s86, 1
      %p90 = scmp.eq.s32.totalorder %s10, 1
      %p91 = scmp.ne.s32.totalorder %s86, %s88
      %p92 = scmp.eq.s32.totalorder %s10, 0
      %p93 = por %p91, %p92
      %p94 = scmp.ne.s32.totalorder %s86, %s88
      %p95 = scmp.eq.s32.totalorder %s15, 1
      %p96 = por %p94, %p95
      %p97 = scmp.ne.s32.totalorder %s88, %s89
      %p98 = scmp.eq.s32.totalorder %s15, 0
      %p99 = por %p97, %p98
      %p100 = scmp.ne.s32.totalorder %s88, %s89
      %p101 = scmp.eq.s32.totalorder %s16, 1
      %p102 = por %p100, %p101
      %p104 = scmp.ne.s32.totalorder %s89, %s103
      %p105 = scmp.eq.s32.totalorder %s16, 0
      %p106 = por %p104, %p105
      %s107 = ssub.s32 %s10, %s17
      %p108 = scmp.eq.s32.totalorder %s107, 0
      %s110 = sadd.s32 %s109, 1
      %s111 = scalar_select %p108, %s109, %s110
      %p114 = pneg %p108
      %p115 = scmp.eq.s32.totalorder %s10, 1
      %p116 = por %p114, %p115
      %p117 = scmp.ne.s32.totalorder %s109, %s112
      %p118 = scmp.eq.s32.totalorder %s10, 0
      %p119 = por %p117, %p118
      %p120 = scmp.ne.s32.totalorder %s109, %s112
      %p121 = scmp.eq.s32.totalorder %s15, 1
      %p122 = por %p120, %p121
      %p123 = scmp.ne.s32.totalorder %s112, %s113
      %p124 = scmp.eq.s32.totalorder %s15, 0
      %p125 = por %p123, %p124
      %p126 = scmp.ne.s32.totalorder %s112, %s113
      %p127 = scmp.eq.s32.totalorder %s16, 1
      %p128 = por %p126, %p127
      %p130 = scmp.ne.s32.totalorder %s113, %s129
      %p131 = scmp.eq.s32.totalorder %s16, 0
      %p132 = por %p130, %p131
      %p133 = scmp.le.s32.totalorder 1, %s10
      %p134 = scmp.lt.s32.totalorder %s10, 3
      %p135 = pnand %p133, %p134
      %p136 = pneg %p135
      // Predicated region
      $region9: #{tpu_custom_call.1} parent=5 // pred_check
        _
      $region10: #{tpu_custom_call.1} parent=5 // pred_check_branch
        %138 = sbr.rel (%p135) target = $region12
      $region11: #{tpu_custom_call.1} parent=5 // pred_region
        %s139 = ssub.s32 %s10, 1
        // Predicated region
        $region13: #{tpu_custom_call.1} parent=11 // pred_check
          %p140 = pneg %p57
        $region14: #{tpu_custom_call.1} parent=11 // pred_check_branch
          %142 = sbr.rel (%p140) target = $region16
        $region15: #{tpu_custom_call.1} parent=11 // pred_region
          _
        $region16: #{tpu_custom_call.1} parent=11 // pred_fallthru
          _
        // Predicated region
        $region17: #{tpu_custom_call.1} parent=11 // pred_check
          %p143 = pneg %p78
        $region18: #{tpu_custom_call.1} parent=11 // pred_check_branch
          %145 = sbr.rel (%p143) target = $region20
        $region19: #{tpu_custom_call.1} parent=11 // pred_region
          _
        $region20: #{tpu_custom_call.1} parent=11 // pred_fallthru
          _
        // Predicated region
        $region21: #{tpu_custom_call.1} parent=11 // pred_check
          %p146 = pneg %p99
        $region22: #{tpu_custom_call.1} parent=11 // pred_check_branch
          %148 = sbr.rel (%p146) target = $region24
        $region23: #{tpu_custom_call.1} parent=11 // pred_region
          _
        $region24: #{tpu_custom_call.1} parent=11 // pred_fallthru
          _
      $region12: #{tpu_custom_call.1} parent=5 // pred_fallthru
        _
      %p149 = scmp.lt.s32.totalorder %s10, 2
      // Predicated region
      $region25: #{tpu_custom_call.1} parent=5 // pred_check
        %p150 = pneg %p149
      $region26: #{tpu_custom_call.1} parent=5 // pred_check_branch
        %152 = sbr.rel (%p150) target = $region28
      $region27: #{tpu_custom_call.1} parent=5 // pred_region
        // Predicated region
        $region29: #{tpu_custom_call.1} parent=27 // pred_check
          %p153 = pneg %p30
        $region30: #{tpu_custom_call.1} parent=27 // pred_check_branch
          %155 = sbr.rel (%p153) target = $region32
        $region31: #{tpu_custom_call.1} parent=27 // pred_region
          %s156 = smul.u32 14, %s10
          %s157 = ssub.s32 25, %s156
          %p158 = scmp.lt.s32.totalorder %s157, 14
          %s159 = scalar_select %p158, %s157, 14
          %s160 = smul.u32 128, %s159
          %p161 = scmp.lt.s32.totalorder %s156, 24
          %s162 = scalar_select %p161, %s156, 24
          %s163 = smul.addr %s162, 8
          %s164 = scalar_lea.vmem %s0, %s163
          %s165 = smul.u32 14, %s10
          %s166 = ssub.s32 25, %s165
          %p167 = scmp.lt.s32.totalorder %s166, 14
          %s168 = scalar_select %p167, %s166, 14
          %s169 = smul.u32 128, %s168
        $region32: #{tpu_custom_call.1} parent=27 // pred_fallthru
          _
      $region28: #{tpu_custom_call.1} parent=5 // pred_fallthru
        _
      %p170 = scmp.le.s32.totalorder 1, %s10
      %p171 = scmp.lt.s32.totalorder %s10, 3
      %p172 = pnand %p170, %p171
      %p173 = pneg %p172
      // Predicated region
      $region33: #{tpu_custom_call.1} parent=5 // pred_check
        _
      $region34: #{tpu_custom_call.1} parent=5 // pred_check_branch
        %175 = sbr.rel (%p172) target = $region36
      $region35: #{tpu_custom_call.1} parent=5 // pred_region
        %s176 = ssub.s32 %s10, 1
        %s177 = smul.u32 14, %s15
        %s178 = ssub.s32 25, %s177
        %p179 = scmp.lt.s32.totalorder %s178, 14
        %s180 = scalar_select %p179, %s178, 14
        %s181 = smul.u32 128, %s180
        %p182 = scmp.lt.s32.totalorder %s177, 24
        %s183 = scalar_select %p182, %s177, 24
        %s184 = smul.addr %s183, 8
        %s185 = scalar_lea.vmem %s0, %s184
        %p186 = pneg %p36
        %p187 = pneg %p33
        %p188 = pneg %p57
        %p189 = pneg %p54
        %p190 = pneg %p78
        %p191 = pneg %p75
        %p192 = pneg %p99
        %p193 = pneg %p96
        %p194 = pneg %p125
        %p195 = pneg %p122
        %s196 = sand.u32 %s112, 1
        %s197 = sand.u32 %s112, 1
        %s198 = smul.addr %s197, 112
        %s199 = scalar_lea.vmem [#allocation2], %s198
        %s200 = smul.u32 14, %s15
        %s201 = ssub.s32 25, %s200
        %p202 = scmp.lt.s32.totalorder %s201, 14
        %s203 = scalar_select %p202, %s201, 14
        %s204 = smul.u32 128, %s203
        %p205 = scmp.lt.s32.totalorder %s200, 24
        %s206 = scalar_select %p205, %s200, 24
        %s207 = smul.addr %s206, 8
        %s208 = scalar_lea.vmem %s0, %s207
        %s209 = smul.u32 14, %s15
        %s210 = ssub.s32 25, %s209
        %p211 = scmp.lt.s32.totalorder %s210, 14
        %s212 = scalar_select %p211, %s210, 14
        %s213 = smul.u32 128, %s212
        %s214 = smul.u32 14, %s15
        %s215 = ssub.s32 25, %s214
        %p216 = scmp.lt.s32.totalorder %s215, 14
        %s217 = scalar_select %p216, %s215, 14
        %s218 = smul.u32 128, %s217
        %v220 = vld [vmem:[%s208] sm:$0xff]
        %v221 = vld [vmem:[%s208 + $0x8] sm:$0xff]
        %v222 = vld [vmem:[%s208 + $0x10] sm:$0xff]
        %v223 = vld [vmem:[%s208 + $0x18] sm:$0xff]
        %v224 = vld [vmem:[%s208 + $0x20] sm:$0xff]
        %v225 = vld [vmem:[%s208 + $0x28] sm:$0xff]
        %v226 = vld [vmem:[%s208 + $0x30] sm:$0xff]
        %v227 = vld [vmem:[%s208 + $0x38] sm:$0xff]
        %v228 = vld [vmem:[%s208 + $0x40] sm:$0xff]
        %v229 = vld [vmem:[%s208 + $0x48] sm:$0xff]
        %v230 = vld [vmem:[%s208 + $0x50] sm:$0xff]
        %v231 = vld [vmem:[%s208 + $0x58] sm:$0xff]
        %v232 = vld [vmem:[%s208 + $0x60] sm:$0xff]
        %v233 = vld [vmem:[%s208 + $0x68] sm:$0xff]
        %v234 = vld [vmem:[%s3] sm:$0x1]
        %v235 = vld [vmem:[%s3 + $0x1] sm:$0x1]
        %v236 = vld [vmem:[%s3 + $0x2] sm:$0x1]
        %v237 = vld [vmem:[%s1] sm:$0x1]
        %239 = vset.pattern.permute.xlu0 0
        %240 = vperm.xlu0 %239, %v220
        %v241 = vpop.permute.xlu0 %240
        %244 = vset.pattern.permute.xlu0 0
        %245 = vperm.xlu0 %244, %v221
        %v246 = vpop.permute.xlu0 %245
        %249 = vset.pattern.permute.xlu0 0
        %250 = vperm.xlu0 %249, %v222
        %v251 = vpop.permute.xlu0 %250
        %254 = vset.pattern.permute.xlu0 0
        %255 = vperm.xlu0 %254, %v223
        %v256 = vpop.permute.xlu0 %255
        %259 = vset.pattern.permute.xlu0 0
        %260 = vperm.xlu0 %259, %v224
        %v261 = vpop.permute.xlu0 %260
        %264 = vset.pattern.permute.xlu0 0
        %265 = vperm.xlu0 %264, %v225
        %v266 = vpop.permute.xlu0 %265
        %269 = vset.pattern.permute.xlu0 0
        %270 = vperm.xlu0 %269, %v226
        %v271 = vpop.permute.xlu0 %270
        %274 = vset.pattern.permute.xlu0 0
        %275 = vperm.xlu0 %274, %v227
        %v276 = vpop.permute.xlu0 %275
        %279 = vset.pattern.permute.xlu0 0
        %280 = vperm.xlu0 %279, %v228
        %v281 = vpop.permute.xlu0 %280
        %284 = vset.pattern.permute.xlu0 0
        %285 = vperm.xlu0 %284, %v229
        %v286 = vpop.permute.xlu0 %285
        %289 = vset.pattern.permute.xlu0 0
        %290 = vperm.xlu0 %289, %v230
        %v291 = vpop.permute.xlu0 %290
        %294 = vset.pattern.permute.xlu0 0
        %295 = vperm.xlu0 %294, %v231
        %v296 = vpop.permute.xlu0 %295
        %299 = vset.pattern.permute.xlu0 0
        %300 = vperm.xlu0 %299, %v232
        %v301 = vpop.permute.xlu0 %300
        %304 = vset.pattern.permute.xlu0 0
        %305 = vperm.xlu0 %304, %v233
        %v306 = vpop.permute.xlu0 %305
        %v308 = vlaneseq
        %v309 = vshrl.u32 %v308, 7
        %v310 = vsub.s32 0, %v309
        %v311 = vrot.slane %v237, %v310
        %v312 = vmul.f32 %v241, %v311
        %v313 = vmul.f32 %v246, %v311
        %v314 = vmul.f32 %v251, %v311
        %v315 = vmul.f32 %v256, %v311
        %v316 = vmul.f32 %v261, %v311
        %v317 = vmul.f32 %v266, %v311
        %v318 = vmul.f32 %v271, %v311
        %v319 = vmul.f32 %v276, %v311
        %v320 = vmul.f32 %v281, %v311
        %v321 = vmul.f32 %v286, %v311
        %v322 = vmul.f32 %v291, %v311
        %v323 = vmul.f32 %v296, %v311
        %v324 = vmul.f32 %v301, %v311
        %v325 = vmul.f32 %v306, %v311
        %v326 = vlaneseq
        %v327 = vshrl.u32 %v326, 7
        %v328 = vsub.s32 0, %v327
        %v329 = vrot.slane %v234, %v328
        %v330 = vadd.f32 %v329, %v312
        %v331 = vadd.f32 %v329, %v313
        %v332 = vadd.f32 %v329, %v314
        %v333 = vadd.f32 %v329, %v315
        %v334 = vadd.f32 %v329, %v316
        %v335 = vadd.f32 %v329, %v317
        %v336 = vadd.f32 %v329, %v318
        %v337 = vadd.f32 %v329, %v319
        %v338 = vadd.f32 %v329, %v320
        %v339 = vadd.f32 %v329, %v321
        %v340 = vadd.f32 %v329, %v322
        %v341 = vadd.f32 %v329, %v323
        %v342 = vadd.f32 %v329, %v324
        %v343 = vadd.f32 %v329, %v325
        %v344 = vld [vmem:[%s1 + $0x1] sm:$0x1]
        %345 = vset.pattern.permute.xlu0 1
        %346 = vperm.xlu0 %345, %v220
        %v347 = vpop.permute.xlu0 %346
        %349 = vset.pattern.permute.xlu0 1
        %350 = vperm.xlu0 %349, %v221
        %v351 = vpop.permute.xlu0 %350
        %353 = vset.pattern.permute.xlu0 1
        %354 = vperm.xlu0 %353, %v222
        %v355 = vpop.permute.xlu0 %354
        %357 = vset.pattern.permute.xlu0 1
        %358 = vperm.xlu0 %357, %v223
        %v359 = vpop.permute.xlu0 %358
        %361 = vset.pattern.permute.xlu0 1
        %362 = vperm.xlu0 %361, %v224
        %v363 = vpop.permute.xlu0 %362
        %365 = vset.pattern.permute.xlu0 1
        %366 = vperm.xlu0 %365, %v225
        %v367 = vpop.permute.xlu0 %366
        %369 = vset.pattern.permute.xlu0 1
        %370 = vperm.xlu0 %369, %v226
        %v371 = vpop.permute.xlu0 %370
        %373 = vset.pattern.permute.xlu0 1
        %374 = vperm.xlu0 %373, %v227
        %v375 = vpop.permute.xlu0 %374
        %377 = vset.pattern.permute.xlu0 1
        %378 = vperm.xlu0 %377, %v228
        %v379 = vpop.permute.xlu0 %378
        %381 = vset.pattern.permute.xlu0 1
        %382 = vperm.xlu0 %381, %v229
        %v383 = vpop.permute.xlu0 %382
        %385 = vset.pattern.permute.xlu0 1
        %386 = vperm.xlu0 %385, %v230
        %v387 = vpop.permute.xlu0 %386
        %389 = vset.pattern.permute.xlu0 1
        %390 = vperm.xlu0 %389, %v231
        %v391 = vpop.permute.xlu0 %390
        %393 = vset.pattern.permute.xlu0 1
        %394 = vperm.xlu0 %393, %v232
        %v395 = vpop.permute.xlu0 %394
        %397 = vset.pattern.permute.xlu0 1
        %398 = vperm.xlu0 %397, %v233
        %v399 = vpop.permute.xlu0 %398
        %v401 = vlaneseq
        %v402 = vshrl.u32 %v401, 7
        %v403 = vsub.s32 0, %v402
        %v404 = vrot.slane %v344, %v403
        %v405 = vmul.f32 %v347, %v404
        %v406 = vmul.f32 %v351, %v404
        %v407 = vmul.f32 %v355, %v404
        %v408 = vmul.f32 %v359, %v404
        %v409 = vmul.f32 %v363, %v404
        %v410 = vmul.f32 %v367, %v404
        %v411 = vmul.f32 %v371, %v404
        %v412 = vmul.f32 %v375, %v404
        %v413 = vmul.f32 %v379, %v404
        %v414 = vmul.f32 %v383, %v404
        %v415 = vmul.f32 %v387, %v404
        %v416 = vmul.f32 %v391, %v404
        %v417 = vmul.f32 %v395, %v404
        %v418 = vmul.f32 %v399, %v404
        %v419 = vadd.f32 %v330, %v405
        %v420 = vadd.f32 %v331, %v406
        %v421 = vadd.f32 %v332, %v407
        %v422 = vadd.f32 %v333, %v408
        %v423 = vadd.f32 %v334, %v409
        %v424 = vadd.f32 %v335, %v410
        %v425 = vadd.f32 %v336, %v411
        %v426 = vadd.f32 %v337, %v412
        %v427 = vadd.f32 %v338, %v413
        %v428 = vadd.f32 %v339, %v414
        %v429 = vadd.f32 %v340, %v415
        %v430 = vadd.f32 %v341, %v416
        %v431 = vadd.f32 %v342, %v417
        %v432 = vadd.f32 %v343, %v418
        %v433 = vld [vmem:[%s1 + $0x2] sm:$0x1]
        %434 = vset.pattern.permute.xlu0 2
        %435 = vperm.xlu0 %434, %v220
        %v436 = vpop.permute.xlu0 %435
        %438 = vset.pattern.permute.xlu0 2
        %439 = vperm.xlu0 %438, %v221
        %v440 = vpop.permute.xlu0 %439
        %442 = vset.pattern.permute.xlu0 2
        %443 = vperm.xlu0 %442, %v222
        %v444 = vpop.permute.xlu0 %443
        %446 = vset.pattern.permute.xlu0 2
        %447 = vperm.xlu0 %446, %v223
        %v448 = vpop.permute.xlu0 %447
        %450 = vset.pattern.permute.xlu0 2
        %451 = vperm.xlu0 %450, %v224
        %v452 = vpop.permute.xlu0 %451
        %454 = vset.pattern.permute.xlu0 2
        %455 = vperm.xlu0 %454, %v225
        %v456 = vpop.permute.xlu0 %455
        %458 = vset.pattern.permute.xlu0 2
        %459 = vperm.xlu0 %458, %v226
        %v460 = vpop.permute.xlu0 %459
        %462 = vset.pattern.permute.xlu0 2
        %463 = vperm.xlu0 %462, %v227
        %v464 = vpop.permute.xlu0 %463
        %466 = vset.pattern.permute.xlu0 2
        %467 = vperm.xlu0 %466, %v228
        %v468 = vpop.permute.xlu0 %467
        %470 = vset.pattern.permute.xlu0 2
        %471 = vperm.xlu0 %470, %v229
        %v472 = vpop.permute.xlu0 %471
        %474 = vset.pattern.permute.xlu0 2
        %475 = vperm.xlu0 %474, %v230
        %v476 = vpop.permute.xlu0 %475
        %478 = vset.pattern.permute.xlu0 2
        %479 = vperm.xlu0 %478, %v231
        %v480 = vpop.permute.xlu0 %479
        %482 = vset.pattern.permute.xlu0 2
        %483 = vperm.xlu0 %482, %v232
        %v484 = vpop.permute.xlu0 %483
        %486 = vset.pattern.permute.xlu0 2
        %487 = vperm.xlu0 %486, %v233
        %v488 = vpop.permute.xlu0 %487
        %v490 = vlaneseq
        %v491 = vshrl.u32 %v490, 7
        %v492 = vsub.s32 0, %v491
        %v493 = vrot.slane %v433, %v492
        %v494 = vmul.f32 %v436, %v493
        %v495 = vmul.f32 %v440, %v493
        %v496 = vmul.f32 %v444, %v493
        %v497 = vmul.f32 %v448, %v493
        %v498 = vmul.f32 %v452, %v493
        %v499 = vmul.f32 %v456, %v493
        %v500 = vmul.f32 %v460, %v493
        %v501 = vmul.f32 %v464, %v493
        %v502 = vmul.f32 %v468, %v493
        %v503 = vmul.f32 %v472, %v493
        %v504 = vmul.f32 %v476, %v493
        %v505 = vmul.f32 %v480, %v493
        %v506 = vmul.f32 %v484, %v493
        %v507 = vmul.f32 %v488, %v493
        %v508 = vadd.f32 %v419, %v494
        %v509 = vadd.f32 %v420, %v495
        %v510 = vadd.f32 %v421, %v496
        %v511 = vadd.f32 %v422, %v497
        %v512 = vadd.f32 %v423, %v498
        %v513 = vadd.f32 %v424, %v499
        %v514 = vadd.f32 %v425, %v500
        %v515 = vadd.f32 %v426, %v501
        %v516 = vadd.f32 %v427, %v502
        %v517 = vadd.f32 %v428, %v503
        %v518 = vadd.f32 %v429, %v504
        %v519 = vadd.f32 %v430, %v505
        %v520 = vadd.f32 %v431, %v506
        %v521 = vadd.f32 %v432, %v507
        %v522 = vld [vmem:[%s1 + $0x3] sm:$0x1]
        %523 = vset.pattern.permute.xlu0 3
        %524 = vperm.xlu0 %523, %v220
        %v525 = vpop.permute.xlu0 %524
        %527 = vset.pattern.permute.xlu0 3
        %528 = vperm.xlu0 %527, %v221
        %v529 = vpop.permute.xlu0 %528
        %531 = vset.pattern.permute.xlu0 3
        %532 = vperm.xlu0 %531, %v222
        %v533 = vpop.permute.xlu0 %532
        %535 = vset.pattern.permute.xlu0 3
        %536 = vperm.xlu0 %535, %v223
        %v537 = vpop.permute.xlu0 %536
        %539 = vset.pattern.permute.xlu0 3
        %540 = vperm.xlu0 %539, %v224
        %v541 = vpop.permute.xlu0 %540
        %543 = vset.pattern.permute.xlu0 3
        %544 = vperm.xlu0 %543, %v225
        %v545 = vpop.permute.xlu0 %544
        %547 = vset.pattern.permute.xlu0 3
        %548 = vperm.xlu0 %547, %v226
        %v549 = vpop.permute.xlu0 %548
        %551 = vset.pattern.permute.xlu0 3
        %552 = vperm.xlu0 %551, %v227
        %v553 = vpop.permute.xlu0 %552
        %555 = vset.pattern.permute.xlu0 3
        %556 = vperm.xlu0 %555, %v228
        %v557 = vpop.permute.xlu0 %556
        %559 = vset.pattern.permute.xlu0 3
        %560 = vperm.xlu0 %559, %v229
        %v561 = vpop.permute.xlu0 %560
        %563 = vset.pattern.permute.xlu0 3
        %564 = vperm.xlu0 %563, %v230
        %v565 = vpop.permute.xlu0 %564
        %567 = vset.pattern.permute.xlu0 3
        %568 = vperm.xlu0 %567, %v231
        %v569 = vpop.permute.xlu0 %568
        %571 = vset.pattern.permute.xlu0 3
        %572 = vperm.xlu0 %571, %v232
        %v573 = vpop.permute.xlu0 %572
        %575 = vset.pattern.permute.xlu0 3
        %576 = vperm.xlu0 %575, %v233
        %v577 = vpop.permute.xlu0 %576
        %v579 = vlaneseq
        %v580 = vshrl.u32 %v579, 7
        %v581 = vsub.s32 0, %v580
        %v582 = vrot.slane %v522, %v581
        %v583 = vmul.f32 %v525, %v582
        %v584 = vmul.f32 %v529, %v582
        %v585 = vmul.f32 %v533, %v582
        %v586 = vmul.f32 %v537, %v582
        %v587 = vmul.f32 %v541, %v582
        %v588 = vmul.f32 %v545, %v582
        %v589 = vmul.f32 %v549, %v582
        %v590 = vmul.f32 %v553, %v582
        %v591 = vmul.f32 %v557, %v582
        %v592 = vmul.f32 %v561, %v582
        %v593 = vmul.f32 %v565, %v582
        %v594 = vmul.f32 %v569, %v582
        %v595 = vmul.f32 %v573, %v582
        %v596 = vmul.f32 %v577, %v582
        %v597 = vadd.f32 %v508, %v583
        %v598 = vadd.f32 %v509, %v584
        %v599 = vadd.f32 %v510, %v585
        %v600 = vadd.f32 %v511, %v586
        %v601 = vadd.f32 %v512, %v587
        %v602 = vadd.f32 %v513, %v588
        %v603 = vadd.f32 %v514, %v589
        %v604 = vadd.f32 %v515, %v590
        %v605 = vadd.f32 %v516, %v591
        %v606 = vadd.f32 %v517, %v592
        %v607 = vadd.f32 %v518, %v593
        %v608 = vadd.f32 %v519, %v594
        %v609 = vadd.f32 %v520, %v595
        %v610 = vadd.f32 %v521, %v596
        %v611 = vmax.f32 %v597, 0.0
        %v612 = vmax.f32 %v598, 0.0
        %v613 = vmax.f32 %v599, 0.0
        %v614 = vmax.f32 %v600, 0.0
        %v615 = vmax.f32 %v601, 0.0
        %v616 = vmax.f32 %v602, 0.0
        %v617 = vmax.f32 %v603, 0.0
        %v618 = vmax.f32 %v604, 0.0
        %v619 = vmax.f32 %v605, 0.0
        %v620 = vmax.f32 %v606, 0.0
        %v621 = vmax.f32 %v607, 0.0
        %v622 = vmax.f32 %v608, 0.0
        %v623 = vmax.f32 %v609, 0.0
        %v624 = vmax.f32 %v610, 0.0
        %v625 = vld [vmem:[%s2] sm:$0xf]
        %v626 = vld [vmem:[%s2 + $0x4] sm:$0xf]
        %v627 = vld [vmem:[%s2 + $0x8] sm:$0xf]
        %v628 = vld [vmem:[%s2 + $0xc] sm:$0xf]
        %v629 = vld [vmem:[%s2 + $0x10] sm:$0xf]
        %v630 = vld [vmem:[%s2 + $0x14] sm:$0xf]
        %v631 = vld [vmem:[%s2 + $0x18] sm:$0xf]
        %v632 = vld [vmem:[%s2 + $0x1c] sm:$0xf]
        %v633 = vld [vmem:[%s2 + $0x20] sm:$0xf]
        %v634 = vld [vmem:[%s2 + $0x24] sm:$0xf]
        %v635 = vld [vmem:[%s2 + $0x28] sm:$0xf]
        %v636 = vld [vmem:[%s2 + $0x2c] sm:$0xf]
        %v637 = vld [vmem:[%s2 + $0x30] sm:$0xf]
        %v638 = vld [vmem:[%s2 + $0x34] sm:$0xf]
        %v639 = vld [vmem:[%s2 + $0x38] sm:$0xf]
        %v640 = vld [vmem:[%s2 + $0x3c] sm:$0xf]
        %v641 = vld [vmem:[%s2 + $0x40] sm:$0xf]
        %v642 = vld [vmem:[%s2 + $0x44] sm:$0xf]
        %v643 = vld [vmem:[%s2 + $0x48] sm:$0xf]
        %v644 = vld [vmem:[%s2 + $0x4c] sm:$0xf]
        %v645 = vld [vmem:[%s2 + $0x50] sm:$0xf]
        %v646 = vld [vmem:[%s2 + $0x54] sm:$0xf]
        %v647 = vld [vmem:[%s2 + $0x58] sm:$0xf]
        %v648 = vld [vmem:[%s2 + $0x5c] sm:$0xf]
        %v649 = vld [vmem:[%s2 + $0x60] sm:$0xf]
        %v650 = vld [vmem:[%s2 + $0x64] sm:$0xf]
        %v651 = vld [vmem:[%s2 + $0x68] sm:$0xf]
        %v652 = vld [vmem:[%s2 + $0x6c] sm:$0xf]
        %v653 = vld [vmem:[%s2 + $0x70] sm:$0xf]
        %v654 = vld [vmem:[%s2 + $0x74] sm:$0xf]
        %v655 = vld [vmem:[%s2 + $0x78] sm:$0xf]
        %v656 = vld [vmem:[%s2 + $0x7c] sm:$0xf]
        %v657 = vpack.c.bf16 %v612, %v611
        %v658 = vpack.c.bf16 %v614, %v613
        %v659 = vpack.c.bf16 %v616, %v615
        %v660 = vpack.c.bf16 %v618, %v617
        %v661 = vpack.c.bf16 %v620, %v619
        %v662 = vpack.c.bf16 %v622, %v621
        %v663 = vpack.c.bf16 %v624, %v623
        %v664 = vlaneseq
        %v665 = vshrl.u32 %v664, 7
        %v666 = vsub.s32 0, %v665
        %v667 = vrot.slane %v235, %v666
        %v684 = vunpack.c.l.b16 %v625
        %v685 = vunpack.c.l.b16 %v626
        %v686 = vunpack.c.l.b16 %v627
        %v687 = vunpack.c.l.b16 %v628
        %v688 = vunpack.c.l.b16 %v629
        %v689 = vunpack.c.l.b16 %v630
        %v690 = vunpack.c.l.b16 %v631
        %v691 = vunpack.c.l.b16 %v632
        %v692 = vunpack.c.l.b16 %v633
        %v693 = vunpack.c.l.b16 %v634
        %v694 = vunpack.c.l.b16 %v635
        %v695 = vunpack.c.l.b16 %v636
        %v696 = vunpack.c.l.b16 %v637
        %v697 = vunpack.c.l.b16 %v638
        %v698 = vunpack.c.l.b16 %v639
        %v699 = vunpack.c.l.b16 %v640
        %v700 = vpack.c.b16 %v685, %v684
        %v701 = vpack.c.b16 %v687, %v686
        %v702 = vpack.c.b16 %v689, %v688
        %v703 = vpack.c.b16 %v691, %v690
        %v704 = vpack.c.b16 %v693, %v692
        %v705 = vpack.c.b16 %v695, %v694
        %v706 = vpack.c.b16 %v697, %v696
        %v707 = vpack.c.b16 %v699, %v698
        %716 = vmatprep.subr.bf16.mxu0 0
        %717 = vmatpush1.bf16.msra.mxu0 %v700
        %718 = vmatprep.subr.bf16.mxu0 0
        %719 = vmatpush1.bf16.msra.mxu0 %v701
        %720 = vmatprep.subr.bf16.mxu0 0
        %721 = vmatpush1.bf16.msra.mxu0 %v702
        %722 = vmatprep.subr.bf16.mxu0 0
        %723 = vmatpush1.bf16.msra.mxu0 %v703
        %724 = vmatprep.subr.bf16.mxu0 0
        %725 = vmatpush1.bf16.msra.mxu0 %v704
        %726 = vmatprep.subr.bf16.mxu0 0
        %727 = vmatpush1.bf16.msra.mxu0 %v705
        %728 = vmatprep.subr.bf16.mxu0 0
        %729 = vmatpush1.bf16.msra.mxu0 %v706
        %730 = vmatprep.subr.bf16.mxu0 0
        %731 = vmatpush1.bf16.msra.mxu0 %v707
        %732 = vmatprep.subr.bf16.mxu0 0
        %733 = vmatpush1.bf16.msra.mxu0 0
        %734 = vmatprep.subr.bf16.mxu0 0
        %735 = vmatpush1.bf16.msra.mxu0 0
        %736 = vmatprep.subr.bf16.mxu0 0
        %737 = vmatpush1.bf16.msra.mxu0 0
        %738 = vmatprep.subr.bf16.mxu0 0
        %739 = vmatpush1.bf16.msra.mxu0 0
        %740 = vmatprep.subr.bf16.mxu0 0
        %741 = vmatpush1.bf16.msra.mxu0 0
        %742 = vmatprep.subr.bf16.mxu0 0
        %743 = vmatpush1.bf16.msra.mxu0 0
        %744 = vmatprep.subr.bf16.mxu0 0
        %745 = vmatpush1.bf16.msra.mxu0 0
        %746 = vmatprep.subr.bf16.mxu0 0
        %747 = vmatpush1.bf16.msra.mxu0 0
        %748 = vmatprep.mubr.bf16.mxu0 0
        %749 = vmatmul.mubr.bf16.gmra.mrb[0].mxu0 %v657
        %v750 = vpop.f32.mrb[0].mxu0
        %v751 = vadd.f32 %v667, %v750
        %v752 = vpop.f32.mrb[0].mxu0
        %v753 = vpop.f32.mrb[0].mxu0
        %v754 = vadd.f32 %v667, %v753
        %v755 = vpop.f32.mrb[0].mxu0
        %756 = vmatprep.mubr.bf16.mxu0 0
        %757 = vmatmul.mubr.bf16.gmra.mrb[0].mxu0 %v658
        %v758 = vpop.f32.mrb[0].mxu0
        %v759 = vadd.f32 %v667, %v758
        %v760 = vpop.f32.mrb[0].mxu0
        %v761 = vpop.f32.mrb[0].mxu0
        %v762 = vadd.f32 %v667, %v761
        %v763 = vpop.f32.mrb[0].mxu0
        %764 = vmatprep.mubr.bf16.mxu0 0
        %765 = vmatmul.mubr.bf16.gmra.mrb[0].mxu0 %v659
        %v766 = vpop.f32.mrb[0].mxu0
        %v767 = vadd.f32 %v667, %v766
        %v768 = vpop.f32.mrb[0].mxu0
        %v769 = vpop.f32.mrb[0].mxu0
        %v770 = vadd.f32 %v667, %v769
        %v771 = vpop.f32.mrb[0].mxu0
        %772 = vmatprep.mubr.bf16.mxu0 0
        %773 = vmatmul.mubr.bf16.gmra.mrb[0].mxu0 %v660
        %v774 = vpop.f32.mrb[0].mxu0
        %v775 = vadd.f32 %v667, %v774
        %v776 = vpop.f32.mrb[0].mxu0
        %v777 = vpop.f32.mrb[0].mxu0
        %v778 = vadd.f32 %v667, %v777
        %v779 = vpop.f32.mrb[0].mxu0
        %780 = vmatprep.mubr.bf16.mxu0 0
        %781 = vmatmul.mubr.bf16.gmra.mrb[0].mxu0 %v661
        %v782 = vpop.f32.mrb[0].mxu0
        %v783 = vadd.f32 %v667, %v782
        %v784 = vpop.f32.mrb[0].mxu0
        %v785 = vpop.f32.mrb[0].mxu0
        %v786 = vadd.f32 %v667, %v785
        %v787 = vpop.f32.mrb[0].mxu0
        %788 = vmatprep.mubr.bf16.mxu0 0
        %789 = vmatmul.mubr.bf16.gmra.mrb[0].mxu0 %v662
        %v790 = vpop.f32.mrb[0].mxu0
        %v791 = vadd.f32 %v667, %v790
        %v792 = vpop.f32.mrb[0].mxu0
        %v793 = vpop.f32.mrb[0].mxu0
        %v794 = vadd.f32 %v667, %v793
        %v795 = vpop.f32.mrb[0].mxu0
        %796 = vmatprep.mubr.bf16.mxu0 0
        %797 = vmatmul.mubr.bf16.gmra.mrb[0].mxu0 %v663
        %v798 = vpop.f32.mrb[0].mxu0
        %v799 = vadd.f32 %v667, %v798
        %v800 = vpop.f32.mrb[0].mxu0
        %v801 = vpop.f32.mrb[0].mxu0
        %v802 = vadd.f32 %v667, %v801
        %v803 = vpop.f32.mrb[0].mxu0
        %804 = vdwg.mxu0
        %v805 = vmax.f32 %v751, 0.0
        %v806 = vmax.f32 %v754, 0.0
        %v807 = vmax.f32 %v759, 0.0
        %v808 = vmax.f32 %v762, 0.0
        %v809 = vmax.f32 %v767, 0.0
        %v810 = vmax.f32 %v770, 0.0
        %v811 = vmax.f32 %v775, 0.0
        %v812 = vmax.f32 %v778, 0.0
        %v813 = vmax.f32 %v783, 0.0
        %v814 = vmax.f32 %v786, 0.0
        %v815 = vmax.f32 %v791, 0.0
        %v816 = vmax.f32 %v794, 0.0
        %v817 = vmax.f32 %v799, 0.0
        %v818 = vmax.f32 %v802, 0.0
        %v819 = vpack.c.bf16 %v806, %v805
        %v820 = vpack.c.bf16 %v808, %v807
        %v821 = vpack.c.bf16 %v810, %v809
        %v822 = vpack.c.bf16 %v812, %v811
        %v823 = vpack.c.bf16 %v814, %v813
        %v824 = vpack.c.bf16 %v816, %v815
        %v825 = vpack.c.bf16 %v818, %v817
        %v826 = vlaneseq
        %v827 = vshrl.u32 %v826, 7
        %v828 = vsub.s32 0, %v827
        %v829 = vrot.slane %v236, %v828
        %v846 = vunpack.c.l.b16 %v641
        %v847 = vunpack.c.l.b16 %v642
        %v848 = vunpack.c.l.b16 %v643
        %v849 = vunpack.c.l.b16 %v644
        %v850 = vunpack.c.l.b16 %v645
        %v851 = vunpack.c.l.b16 %v646
        %v852 = vunpack.c.l.b16 %v647
        %v853 = vunpack.c.l.b16 %v648
        %v854 = vunpack.c.l.b16 %v649
        %v855 = vunpack.c.l.b16 %v650
        %v856 = vunpack.c.l.b16 %v651
        %v857 = vunpack.c.l.b16 %v652
        %v858 = vunpack.c.l.b16 %v653
        %v859 = vunpack.c.l.b16 %v654
        %v860 = vunpack.c.l.b16 %v655
        %v861 = vunpack.c.l.b16 %v656
        %v862 = vpack.c.b16 %v847, %v846
        %v863 = vpack.c.b16 %v849, %v848
        %v864 = vpack.c.b16 %v851, %v850
        %v865 = vpack.c.b16 %v853, %v852
        %v866 = vpack.c.b16 %v855, %v854
        %v867 = vpack.c.b16 %v857, %v856
        %v868 = vpack.c.b16 %v859, %v858
        %v869 = vpack.c.b16 %v861, %v860
        %878 = vmatprep.subr.bf16.mxu0 0
        %879 = vmatpush1.bf16.msra.mxu0 %v862
        %880 = vmatprep.subr.bf16.mxu0 0
        %881 = vmatpush1.bf16.msra.mxu0 %v863
        %882 = vmatprep.subr.bf16.mxu0 0
        %883 = vmatpush1.bf16.msra.mxu0 %v864
        %884 = vmatprep.subr.bf16.mxu0 0
        %885 = vmatpush1.bf16.msra.mxu0 %v865
        %886 = vmatprep.subr.bf16.mxu0 0
        %887 = vmatpush1.bf16.msra.mxu0 %v866
        %888 = vmatprep.subr.bf16.mxu0 0
        %889 = vmatpush1.bf16.msra.mxu0 %v867
        %890 = vmatprep.subr.bf16.mxu0 0
        %891 = vmatpush1.bf16.msra.mxu0 %v868
        %892 = vmatprep.subr.bf16.mxu0 0
        %893 = vmatpush1.bf16.msra.mxu0 %v869
        %894 = vmatprep.subr.bf16.mxu0 0
        %895 = vmatpush1.bf16.msra.mxu0 0
        %896 = vmatprep.subr.bf16.mxu0 0
        %897 = vmatpush1.bf16.msra.mxu0 0
        %898 = vmatprep.subr.bf16.mxu0 0
        %899 = vmatpush1.bf16.msra.mxu0 0
        %900 = vmatprep.subr.bf16.mxu0 0
        %901 = vmatpush1.bf16.msra.mxu0 0
        %902 = vmatprep.subr.bf16.mxu0 0
        %903 = vmatpush1.bf16.msra.mxu0 0
        %904 = vmatprep.subr.bf16.mxu0 0
        %905 = vmatpush1.bf16.msra.mxu0 0
        %906 = vmatprep.subr.bf16.mxu0 0
        %907 = vmatpush1.bf16.msra.mxu0 0
        %908 = vmatprep.subr.bf16.mxu0 0
        %909 = vmatpush1.bf16.msra.mxu0 0
        %910 = vmatprep.mubr.bf16.mxu0 0
        %911 = vmatmul.mubr.bf16.gmra.mrb[0].mxu0 %v819
        %v912 = vpop.f32.mrb[0].mxu0
        %v913 = vadd.f32 %v829, %v912
        %v914 = vpop.f32.mrb[0].mxu0
        %v915 = vpop.f32.mrb[0].mxu0
        %v916 = vadd.f32 %v829, %v915
        %v917 = vpop.f32.mrb[0].mxu0
        %918 = vmatprep.mubr.bf16.mxu0 0
        %919 = vmatmul.mubr.bf16.gmra.mrb[0].mxu0 %v820
        %v920 = vpop.f32.mrb[0].mxu0
        %v921 = vadd.f32 %v829, %v920
        %v922 = vpop.f32.mrb[0].mxu0
        %v923 = vpop.f32.mrb[0].mxu0
        %v924 = vadd.f32 %v829, %v923
        %v925 = vpop.f32.mrb[0].mxu0
        %926 = vmatprep.mubr.bf16.mxu0 0
        %927 = vmatmul.mubr.bf16.gmra.mrb[0].mxu0 %v821
        %v928 = vpop.f32.mrb[0].mxu0
        %v929 = vadd.f32 %v829, %v928
        %v930 = vpop.f32.mrb[0].mxu0
        %v931 = vpop.f32.mrb[0].mxu0
        %v932 = vadd.f32 %v829, %v931
        %v933 = vpop.f32.mrb[0].mxu0
        %934 = vmatprep.mubr.bf16.mxu0 0
        %935 = vmatmul.mubr.bf16.gmra.mrb[0].mxu0 %v822
        %v936 = vpop.f32.mrb[0].mxu0
        %v937 = vadd.f32 %v829, %v936
        %v938 = vpop.f32.mrb[0].mxu0
        %v939 = vpop.f32.mrb[0].mxu0
        %v940 = vadd.f32 %v829, %v939
        %v941 = vpop.f32.mrb[0].mxu0
        %942 = vmatprep.mubr.bf16.mxu0 0
        %943 = vmatmul.mubr.bf16.gmra.mrb[0].mxu0 %v823
        %v944 = vpop.f32.mrb[0].mxu0
        %v945 = vadd.f32 %v829, %v944
        %v946 = vpop.f32.mrb[0].mxu0
        %v947 = vpop.f32.mrb[0].mxu0
        %v948 = vadd.f32 %v829, %v947
        %v949 = vpop.f32.mrb[0].mxu0
        %950 = vmatprep.mubr.bf16.mxu0 0
        %951 = vmatmul.mubr.bf16.gmra.mrb[0].mxu0 %v824
        %v952 = vpop.f32.mrb[0].mxu0
        %v953 = vadd.f32 %v829, %v952
        %v954 = vpop.f32.mrb[0].mxu0
        %v955 = vpop.f32.mrb[0].mxu0
        %v956 = vadd.f32 %v829, %v955
        %v957 = vpop.f32.mrb[0].mxu0
        %958 = vmatprep.mubr.bf16.mxu0 0
        %959 = vmatmul.mubr.bf16.gmra.mrb[0].mxu0 %v825
        %v960 = vpop.f32.mrb[0].mxu0
        %v961 = vadd.f32 %v829, %v960
        %v962 = vpop.f32.mrb[0].mxu0
        %v963 = vpop.f32.mrb[0].mxu0
        %v964 = vadd.f32 %v829, %v963
        %v965 = vpop.f32.mrb[0].mxu0
        %966 = vdwg.mxu0
        %vm967 = vcmask 64512
        %968 = vst.msk [vmem:[%s199] sm:$0xff] %vm967, %v913
        %969 = vst.msk [vmem:[%s199 + $0x8] sm:$0xff] %vm967, %v916
        %970 = vst.msk [vmem:[%s199 + $0x10] sm:$0xff] %vm967, %v921
        %971 = vst.msk [vmem:[%s199 + $0x18] sm:$0xff] %vm967, %v924
        %972 = vst.msk [vmem:[%s199 + $0x20] sm:$0xff] %vm967, %v929
        %973 = vst.msk [vmem:[%s199 + $0x28] sm:$0xff] %vm967, %v932
        %974 = vst.msk [vmem:[%s199 + $0x30] sm:$0xff] %vm967, %v937
        %975 = vst.msk [vmem:[%s199 + $0x38] sm:$0xff] %vm967, %v940
        %976 = vst.msk [vmem:[%s199 + $0x40] sm:$0xff] %vm967, %v945
        %977 = vst.msk [vmem:[%s199 + $0x48] sm:$0xff] %vm967, %v948
        %978 = vst.msk [vmem:[%s199 + $0x50] sm:$0xff] %vm967, %v953
        %979 = vst.msk [vmem:[%s199 + $0x58] sm:$0xff] %vm967, %v956
        %980 = vst.msk [vmem:[%s199 + $0x60] sm:$0xff] %vm967, %v961
        %981 = vst.msk [vmem:[%s199 + $0x68] sm:$0xff] %vm967, %v964
        %s982 = sand.u32 %s112, 1
        %s983 = sand.u32 %s112, 1
        %s984 = smul.addr %s983, 112
        %s985 = scalar_lea.vmem [#allocation2], %s984
        // Predicated region
        $region37: #{tpu_custom_call.1} parent=35 // pred_check
          %p986 = pneg %p122
        $region38: #{tpu_custom_call.1} parent=35 // pred_check_branch
          %988 = sbr.rel (%p986) target = $region40
        $region39: #{tpu_custom_call.1} parent=35 // pred_region
          %s989 = smul.u32 14, %s15
          %s990 = ssub.s32 25, %s989
          %p991 = scmp.lt.s32.totalorder %s990, 14
          %s992 = scalar_select %p991, %s990, 14
          %s993 = smul.u32 128, %s992
          %p994 = scmp.ne.s32.totalorder 0, %s993
          %s995 = smul.addr %s989, 8
          %s996 = scalar_lea.vmem %s4, %s995
          // Predicated region
          $region41: #{tpu_custom_call.1} parent=39 // pred_check
            %p997 = pneg %p994
          $region42: #{tpu_custom_call.1} parent=39 // pred_check_branch
            %999 = sbr.rel (%p997) target = $region44
          $region43: #{tpu_custom_call.1} parent=39 // pred_region
            // Predicated region
            $region45: #{tpu_custom_call.1} parent=43 // pred_check
              _
            $region46: #{tpu_custom_call.1} parent=43 // pred_check_branch
              %1001 = sbr.rel (0) target = $region48
            $region47: #{tpu_custom_call.1} parent=43 // pred_region
              // Predicated region
              $region67: #{tpu_custom_call.1} parent=47 // pred_check
                _
              $region68: #{tpu_custom_call.1} parent=47 // pred_check_branch
                %1077 = sbr.rel (0) target = $region70
              $region69: #{tpu_custom_call.1} parent=47 // pred_region
                %s1078 = sdiv.u32.pop %s992, 14
                %s1079 = srem.u32.pop %s992, 14
                // While loop
                $region71: #{tpu_custom_call.1} parent=69 // loop_pre_header
                  _
                $region72: #{tpu_custom_call.1} parent=69 // loop_header
                  %s1081 = sphi 0, %s1083
                  %p1082 = scmp.ge.s32.totalorder %s1081, %s1078
                  %s1086 = sphi 0, %s1119
                  %s1087 = sphi %s985, %s1122
                  %s1088 = sphi %s996, %s1123
                $region73: #{tpu_custom_call.1} parent=69 // loop_header_branch
                  %1085 = sbr.rel (%p1082) target = $region77
                $region74: #{tpu_custom_call.1} parent=69 // loop_body
                  %v1089 = vld [vmem:[%s1087] sm:$0xff]
                  %1090 = vst [vmem:[%s1088] sm:$0xff] %v1089
                  %v1091 = vld [vmem:[%s1087 + $0x8] sm:$0xff]
                  %1092 = vst [vmem:[%s1088 + $0x8] sm:$0xff] %v1091
                  %v1093 = vld [vmem:[%s1087 + $0x10] sm:$0xff]
                  %1094 = vst [vmem:[%s1088 + $0x10] sm:$0xff] %v1093
                  %v1095 = vld [vmem:[%s1087 + $0x18] sm:$0xff]
                  %1096 = vst [vmem:[%s1088 + $0x18] sm:$0xff] %v1095
                  %v1097 = vld [vmem:[%s1087 + $0x20] sm:$0xff]
                  %1098 = vst [vmem:[%s1088 + $0x20] sm:$0xff] %v1097
                  %v1099 = vld [vmem:[%s1087 + $0x28] sm:$0xff]
                  %1100 = vst [vmem:[%s1088 + $0x28] sm:$0xff] %v1099
                  %v1101 = vld [vmem:[%s1087 + $0x30] sm:$0xff]
                  %1102 = vst [vmem:[%s1088 + $0x30] sm:$0xff] %v1101
                  %v1103 = vld [vmem:[%s1087 + $0x38] sm:$0xff]
                  %1104 = vst [vmem:[%s1088 + $0x38] sm:$0xff] %v1103
                  %v1105 = vld [vmem:[%s1087 + $0x40] sm:$0xff]
                  %1106 = vst [vmem:[%s1088 + $0x40] sm:$0xff] %v1105
                  %v1107 = vld [vmem:[%s1087 + $0x48] sm:$0xff]
                  %1108 = vst [vmem:[%s1088 + $0x48] sm:$0xff] %v1107
                  %v1109 = vld [vmem:[%s1087 + $0x50] sm:$0xff]
                  %1110 = vst [vmem:[%s1088 + $0x50] sm:$0xff] %v1109
                  %v1111 = vld [vmem:[%s1087 + $0x58] sm:$0xff]
                  %1112 = vst [vmem:[%s1088 + $0x58] sm:$0xff] %v1111
                  %v1113 = vld [vmem:[%s1087 + $0x60] sm:$0xff]
                  %1114 = vst [vmem:[%s1088 + $0x60] sm:$0xff] %v1113
                  %v1115 = vld [vmem:[%s1087 + $0x68] sm:$0xff]
                  %1116 = vst [vmem:[%s1088 + $0x68] sm:$0xff] %v1115
                  %s1117 = sadd.s32 1, %s1086
                  %p1118 = scmp.ge.s32.totalorder %s1117, %s1078
                  %s1119 = scalar_select %p1118, 0, %s1117
                  %s1120 = smul.u32 %s1119, 112
                  %s1121 = smul.u32 %s1119, 112
                  %s1122 = scalar_lea.vmem %s985, %s1120 [#allocation2]
                  %s1123 = scalar_lea.vmem %s996, %s1121
                $region75: #{tpu_custom_call.1} parent=69 // loop_footer
                  %s1083 = sadd.s32 %s1081, 1
                $region76: #{tpu_custom_call.1} parent=69 // loop_footer_branch
                  %1080 = sbr.rel target = $region72
                $region77: #{tpu_custom_call.1} parent=69 // loop_exit
                  _
                %s1124 = sdiv.u32.pop %s992, 14
                %s1125 = srem.u32.pop %s992, 14
                %s1126 = smul.u32 %s1124, 14
                %s1127 = smul.u32 8, %s1126
                %s1128 = scalar_lea.vmem %s985, %s1127 [#allocation2]
                %s1129 = smul.u32 8, %s1126
                %s1130 = scalar_lea.vmem %s996, %s1129
                // While loop
                $region78: #{tpu_custom_call.1} parent=69 // loop_pre_header
                  _
                $region79: #{tpu_custom_call.1} parent=69 // loop_header
                  %s1132 = sphi 0, %s1134
                  %p1133 = scmp.ge.s32.totalorder %s1132, %s1125
                  %s1137 = sphi 0, %s1144
                  %s1138 = sphi %s1128, %s1147
                  %s1139 = sphi %s1130, %s1148
                $region80: #{tpu_custom_call.1} parent=69 // loop_header_branch
                  %1136 = sbr.rel (%p1133) target = $region84
                $region81: #{tpu_custom_call.1} parent=69 // loop_body
                  %v1140 = vld [vmem:[%s1138] sm:$0xff]
                  %1141 = vst [vmem:[%s1139] sm:$0xff] %v1140
                  %s1142 = sadd.s32 1, %s1137
                  %p1143 = scmp.ge.s32.totalorder %s1142, %s1125
                  %s1144 = scalar_select %p1143, 0, %s1142
                  %s1145 = smul.u32 %s1144, 8
                  %s1146 = smul.u32 %s1144, 8
                  %s1147 = scalar_lea.vmem %s1128, %s1145 [#allocation2]
                  %s1148 = scalar_lea.vmem %s1130, %s1146
                $region82: #{tpu_custom_call.1} parent=69 // loop_footer
                  %s1134 = sadd.s32 %s1132, 1
                $region83: #{tpu_custom_call.1} parent=69 // loop_footer_branch
                  %1131 = sbr.rel target = $region79
                $region84: #{tpu_custom_call.1} parent=69 // loop_exit
                  _
              $region70: #{tpu_custom_call.1} parent=47 // pred_fallthru
                _
              // Predicated region
              $region85: #{tpu_custom_call.1} parent=47 // pred_check
                _
              $region86: #{tpu_custom_call.1} parent=47 // pred_check_branch
                %1150 = sbr.rel target = $region88
              $region87: #{tpu_custom_call.1} parent=47 // pred_region
                _
              $region88: #{tpu_custom_call.1} parent=47 // pred_fallthru
                _
            $region48: #{tpu_custom_call.1} parent=43 // pred_fallthru
              _
            // Predicated region
            $region49: #{tpu_custom_call.1} parent=43 // pred_check
              _
            $region50: #{tpu_custom_call.1} parent=43 // pred_check_branch
              %1003 = sbr.rel target = $region52
            $region51: #{tpu_custom_call.1} parent=43 // pred_region
              %s1005 = sdiv.u32.pop %s992, 14
              %s1006 = srem.u32.pop %s992, 14
              // While loop
              $region53: #{tpu_custom_call.1} parent=51 // loop_pre_header
                _
              $region54: #{tpu_custom_call.1} parent=51 // loop_header
                %s1008 = sphi 0, %s1010
                %p1009 = scmp.ge.s32.totalorder %s1008, %s1005
                %s1013 = sphi 0, %s1046
                %s1014 = sphi %s985, %s1049
                %s1015 = sphi %s996, %s1050
              $region55: #{tpu_custom_call.1} parent=51 // loop_header_branch
                %1012 = sbr.rel (%p1009) target = $region59
              $region56: #{tpu_custom_call.1} parent=51 // loop_body
                %v1016 = vld [vmem:[%s1014] sm:$0xff]
                %1017 = vst [vmem:[%s1015] sm:$0xff] %v1016
                %v1018 = vld [vmem:[%s1014 + $0x8] sm:$0xff]
                %1019 = vst [vmem:[%s1015 + $0x8] sm:$0xff] %v1018
                %v1020 = vld [vmem:[%s1014 + $0x10] sm:$0xff]
                %1021 = vst [vmem:[%s1015 + $0x10] sm:$0xff] %v1020
                %v1022 = vld [vmem:[%s1014 + $0x18] sm:$0xff]
                %1023 = vst [vmem:[%s1015 + $0x18] sm:$0xff] %v1022
                %v1024 = vld [vmem:[%s1014 + $0x20] sm:$0xff]
                %1025 = vst [vmem:[%s1015 + $0x20] sm:$0xff] %v1024
                %v1026 = vld [vmem:[%s1014 + $0x28] sm:$0xff]
                %1027 = vst [vmem:[%s1015 + $0x28] sm:$0xff] %v1026
                %v1028 = vld [vmem:[%s1014 + $0x30] sm:$0xff]
                %1029 = vst [vmem:[%s1015 + $0x30] sm:$0xff] %v1028
                %v1030 = vld [vmem:[%s1014 + $0x38] sm:$0xff]
                %1031 = vst [vmem:[%s1015 + $0x38] sm:$0xff] %v1030
                %v1032 = vld [vmem:[%s1014 + $0x40] sm:$0xff]
                %1033 = vst [vmem:[%s1015 + $0x40] sm:$0xff] %v1032
                %v1034 = vld [vmem:[%s1014 + $0x48] sm:$0xff]
                %1035 = vst [vmem:[%s1015 + $0x48] sm:$0xff] %v1034
                %v1036 = vld [vmem:[%s1014 + $0x50] sm:$0xff]
                %1037 = vst [vmem:[%s1015 + $0x50] sm:$0xff] %v1036
                %v1038 = vld [vmem:[%s1014 + $0x58] sm:$0xff]
                %1039 = vst [vmem:[%s1015 + $0x58] sm:$0xff] %v1038
                %v1040 = vld [vmem:[%s1014 + $0x60] sm:$0xff]
                %1041 = vst [vmem:[%s1015 + $0x60] sm:$0xff] %v1040
                %v1042 = vld [vmem:[%s1014 + $0x68] sm:$0xff]
                %1043 = vst [vmem:[%s1015 + $0x68] sm:$0xff] %v1042
                %s1044 = sadd.s32 1, %s1013
                %p1045 = scmp.ge.s32.totalorder %s1044, %s1005
                %s1046 = scalar_select %p1045, 0, %s1044
                %s1047 = smul.u32 %s1046, 112
                %s1048 = smul.u32 %s1046, 112
                %s1049 = scalar_lea.vmem %s985, %s1047 [#allocation2]
                %s1050 = scalar_lea.vmem %s996, %s1048
              $region57: #{tpu_custom_call.1} parent=51 // loop_footer
                %s1010 = sadd.s32 %s1008, 1
              $region58: #{tpu_custom_call.1} parent=51 // loop_footer_branch
                %1007 = sbr.rel target = $region54
              $region59: #{tpu_custom_call.1} parent=51 // loop_exit
                _
              %s1051 = sdiv.u32.pop %s992, 14
              %s1052 = srem.u32.pop %s992, 14
              %s1053 = smul.u32 %s1051, 14
              %s1054 = smul.u32 8, %s1053
              %s1055 = scalar_lea.vmem %s985, %s1054 [#allocation2]
              %s1056 = smul.u32 8, %s1053
              %s1057 = scalar_lea.vmem %s996, %s1056
              // While loop
              $region60: #{tpu_custom_call.1} parent=51 // loop_pre_header
                _
              $region61: #{tpu_custom_call.1} parent=51 // loop_header
                %s1059 = sphi 0, %s1061
                %p1060 = scmp.ge.s32.totalorder %s1059, %s1052
                %s1064 = sphi 0, %s1071
                %s1065 = sphi %s1055, %s1074
                %s1066 = sphi %s1057, %s1075
              $region62: #{tpu_custom_call.1} parent=51 // loop_header_branch
                %1063 = sbr.rel (%p1060) target = $region66
              $region63: #{tpu_custom_call.1} parent=51 // loop_body
                %v1067 = vld [vmem:[%s1065] sm:$0xff]
                %1068 = vst [vmem:[%s1066] sm:$0xff] %v1067
                %s1069 = sadd.s32 1, %s1064
                %p1070 = scmp.ge.s32.totalorder %s1069, %s1052
                %s1071 = scalar_select %p1070, 0, %s1069
                %s1072 = smul.u32 %s1071, 8
                %s1073 = smul.u32 %s1071, 8
                %s1074 = scalar_lea.vmem %s1055, %s1072 [#allocation2]
                %s1075 = scalar_lea.vmem %s1057, %s1073
              $region64: #{tpu_custom_call.1} parent=51 // loop_footer
                %s1061 = sadd.s32 %s1059, 1
              $region65: #{tpu_custom_call.1} parent=51 // loop_footer_branch
                %1058 = sbr.rel target = $region61
              $region66: #{tpu_custom_call.1} parent=51 // loop_exit
                _
            $region52: #{tpu_custom_call.1} parent=43 // pred_fallthru
              _
          $region44: #{tpu_custom_call.1} parent=39 // pred_fallthru
            _
          %1151 = vnop
        $region40: #{tpu_custom_call.1} parent=35 // pred_fallthru
          _
      $region36: #{tpu_custom_call.1} parent=5 // pred_fallthru
        _
      %p1152 = scmp.le.s32.totalorder 2, %s10
      // Predicated region
      $region89: #{tpu_custom_call.1} parent=5 // pred_check
        %p1153 = pneg %p1152
      $region90: #{tpu_custom_call.1} parent=5 // pred_check_branch
        %1155 = sbr.rel (%p1153) target = $region92
      $region91: #{tpu_custom_call.1} parent=5 // pred_region
        %s1156 = ssub.s32 %s10, 2
        // Predicated region
        $region93: #{tpu_custom_call.1} parent=91 // pred_check
          %p1157 = pneg %p128
        $region94: #{tpu_custom_call.1} parent=91 // pred_check_branch
          %1159 = sbr.rel (%p1157) target = $region96
        $region95: #{tpu_custom_call.1} parent=91 // pred_region
          %s1160 = sand.u32 %s113, 1
          %s1161 = sand.u32 %s113, 1
          %s1162 = smul.addr %s1161, 112
          %s1163 = scalar_lea.vmem [#allocation2], %s1162
        $region96: #{tpu_custom_call.1} parent=91 // pred_fallthru
          _
      $region92: #{tpu_custom_call.1} parent=5 // pred_fallthru
        _
    $region6: #{tpu_custom_call.1} parent=1 // loop_footer
      %s14 = sadd.s32 1, %s10
    $region7: #{tpu_custom_call.1} parent=1 // loop_footer_branch
      %9 = sbr.rel target = $region3
    $region8: #{tpu_custom_call.1} parent=1 // loop_exit
      _

</llo_original>
